<compile_context>
chip_gen: v5e
topology: v5e:2x2
jax: 0.10.0
libtpu: 0.0.40
codegen_flags: <defaults>
</compile_context>

<pallas_src>
import functools
import math

import jax
import jax.numpy as jnp
from jax.experimental import pallas as pl
from jax.experimental.pallas import tpu as pltpu

EPS = 1e-5
_LANE = 128
_SUBLANE = {4: 8, 2: 16, 1: 32}   # dtype itemsize -> sublane multiple


def _pick_pack_factor(rows, hidden):
    """How many logical rows to pack along the lane axis (1 = no packing)."""
    if hidden >= _LANE:
        return 1
    k = _LANE // math.gcd(hidden, _LANE)   # smallest k with k*hidden % 128 == 0
    if 1 < k <= 16 and rows % k == 0:
        return k
    return 1


def _pick_tile_rows(rows, row_bytes, itemsize):
    """Rows per block: ~2 MiB of input per block, dtype-aware sublane multiple."""
    mult = _SUBLANE.get(itemsize, 8)
    if rows <= mult:
        return rows                      # single tiny block (full-dim block is legal)
    target_bytes = 2 << 20               # ~2 MiB/block -> ~85%+ of HBM roofline
    t = (target_bytes // max(row_bytes, 1)) // mult * mult
    t = max(t, mult)
    t = min(t, 8192)
    # Keep at least 2 grid steps so v7x's two TensorCores both get work.
    half = -(-rows // 2)
    half = -(-half // mult) * mult
    return max(mult, min(t, half))


def _make_kernel(has_bias, group_h, num_groups):
    """Build a LayerNorm kernel.

    The block's last dim is num_groups * group_h; each contiguous group of
    group_h lanes is an independent logical row (num_groups == 1 is the plain,
    unpacked case).
    """

    def _normalize(xg):
        h = xg.shape[-1]
        inv_h = 1.0 / h
        # Fused single pass: sum and sum-of-squares, f32 accumulation.
        s = jnp.sum(xg, axis=-1, keepdims=True)
        s2 = jnp.sum(xg * xg, axis=-1, keepdims=True)
        mean = s * inv_h
        var = s2 * inv_h - mean * mean
        return (xg - mean) * jax.lax.rsqrt(var + EPS)

    def kernel(*refs):
        if has_bias:
            x_ref, w_ref, b_ref, o_ref = refs
        else:
            x_ref, w_ref, o_ref = refs
            b_ref = None

        x = x_ref[...].astype(jnp.float32)       # (tile_rows, num_groups*group_h)

        if num_groups == 1:
            y = _normalize(x)
        else:
            parts = [
                _normalize(x[:, g * group_h:(g + 1) * group_h])
                for g in range(num_groups)
            ]
            y = jnp.concatenate(parts, axis=-1)

        y = y * w_ref[...].astype(jnp.float32)
        if has_bias:
            y = y + b_ref[...].astype(jnp.float32)
        o_ref[...] = y.astype(o_ref.dtype)

    return kernel


@functools.partial(jax.jit, static_argnames=("tile_rows", "group_h", "num_groups"))
def _layernorm_2d(x2d, w2d, b2d, *, tile_rows, group_h, num_groups):
    rows, cols = x2d.shape
    grid = (pl.cdiv(rows, tile_rows),)           # ragged last block handled by Pallas

    x_spec = pl.BlockSpec((tile_rows, cols), lambda i: (i, 0))
    p_spec = pl.BlockSpec((1, cols), lambda i: (0, 0))   # resident across grid steps
    out_spec = pl.BlockSpec((tile_rows, cols), lambda i: (i, 0))

    has_bias = b2d is not None
    kernel = _make_kernel(has_bias, group_h, num_groups)

    operands = (x2d, w2d) + ((b2d,) if has_bias else ())
    in_specs = [x_spec, p_spec] + ([p_spec] if has_bias else [])

    itemsize = jnp.dtype(x2d.dtype).itemsize
    block_bytes = tile_rows * cols * itemsize
    # 2x double-buffered in + out blocks + in-kernel f32 temporaries + headroom,
    # capped at 48 MiB to stay within v7x's 64 MiB physical VMEM.
    vmem_limit = int(min(48 << 20, max(16 << 20, 16 * block_bytes)))

    return pl.pallas_call(
        kernel,
        out_shape=jax.ShapeDtypeStruct((rows, cols), x2d.dtype),
        grid_spec=pltpu.PrefetchScalarGridSpec(
            num_scalar_prefetch=0,
            grid=grid,
            in_specs=in_specs,
            out_specs=out_spec,
        ),
        compiler_params=pltpu.CompilerParams(
            dimension_semantics=("parallel",),
            vmem_limit_bytes=vmem_limit,
        ),
    )(*operands)


def layer_norm(x, weight, bias=None, *, tile_rows=None):
    """LayerNorm over the last dim of x (eps=1e-5). weight/bias shape: (hidden,)."""
    hidden = x.shape[-1]
    assert weight.shape == (hidden,)
    orig_shape = x.shape

    x2d = x.reshape(-1, hidden)
    rows = x2d.shape[0]

    # Lane-pack small hidden dims so HBM loads/stores are full 128-lane width.
    k = _pick_pack_factor(rows, hidden)
    if k > 1:
        x2d = x2d.reshape(rows // k, k * hidden)     # contiguous reshape: no HBM copy
        w2d = jnp.tile(weight, k).reshape(1, k * hidden)
        b2d = jnp.tile(bias, k).reshape(1, k * hidden) if bias is not None else None
    else:
        w2d = weight.reshape(1, hidden)
        b2d = bias.reshape(1, hidden) if bias is not None else None

    p_rows, p_cols = x2d.shape
    itemsize = jnp.dtype(x2d.dtype).itemsize
    if tile_rows is None:
        tile_rows = _pick_tile_rows(p_rows, p_cols * itemsize, itemsize)

    y2d = _layernorm_2d(x2d, w2d, b2d,
                        tile_rows=tile_rows, group_h=hidden, num_groups=k)
    return y2d.reshape(orig_shape)


def _reference_layernorm(x, w, b):
    mean = jnp.mean(x, axis=-1, keepdims=True)
    var = jnp.mean((x - mean) ** 2, axis=-1, keepdims=True)
    y = (x - mean) / jnp.sqrt(var + EPS) * w
    return y + b if b is not None else y


if __name__ == "__main__":
    # Module config: LayerNorm(ndim=32, bias=True)
    batch, seq, hidden = 2, 8, 32
    key = jax.random.PRNGKey(0)
    x = jax.random.normal(key, (batch, seq, hidden), dtype=jnp.float32)

    # Deterministic parameter init matching nn.Parameter(torch.ones/zeros(ndim))
    weight = jnp.ones((hidden,), dtype=jnp.float32)
    bias = jnp.zeros((hidden,), dtype=jnp.float32)

    y = jax.block_until_ready(layer_norm(x, weight, bias))
    ref = _reference_layernorm(x, weight, bias)
    assert jnp.allclose(y, ref, atol=1e-5, rtol=1e-5), "mismatch vs reference (init params)"

    # Same shapes with non-trivial weight/bias (exercises lane-packed affine path).
    kw, kb = jax.random.split(jax.random.PRNGKey(1))
    w_r = jax.random.normal(kw, (hidden,), dtype=jnp.float32)
    b_r = jax.random.normal(kb, (hidden,), dtype=jnp.float32)
    y_r = jax.block_until_ready(layer_norm(x, w_r, b_r))
    assert jnp.allclose(y_r, _reference_layernorm(x, w_r, b_r), atol=1e-5, rtol=1e-5), \
        "mismatch vs reference (random params, packed path)"

    # Unpacked path, no bias, ragged grid (rows % tile_rows != 0).
    x2 = jax.random.normal(jax.random.PRNGKey(2), (3, 5, 256), dtype=jnp.float32)
    w2 = jax.random.normal(jax.random.PRNGKey(3), (256,), dtype=jnp.float32)
    y2 = jax.block_until_ready(layer_norm(x2, w2, None))
    assert jnp.allclose(y2, _reference_layernorm(x2, w2, None), atol=1e-5, rtol=1e-5), \
        "mismatch vs reference (unpacked, no-bias, ragged grid)"

    print("KERNEL_OK")
</pallas_src>

<mosaic_0001>
module attributes {stable_mosaic.version = 11 : i64} {
  func.func @kernel(%arg0: i32, %arg1: memref<4x128xf32, #tpu.memory_space<vmem>>, %arg2: memref<1x128xf32, #tpu.memory_space<vmem>>, %arg3: memref<1x128xf32, #tpu.memory_space<vmem>>, %arg4: memref<4x128xf32, #tpu.memory_space<vmem>>) attributes {dimension_semantics = [#tpu.dimension_semantics<parallel>], iteration_bounds = array<i64: 1>, scalar_prefetch = 0 : i64, scratch_operands = 0 : i64, tpu.core_type = #tpu.core_type<tc>, window_params = [{transform_indices = @transform_0, window_bounds = array<i64: 4, 128>}, {pipeline_mode = #tpu.pipeline_mode<synchronous>, transform_indices = @transform_1, window_bounds = array<i64: 1, 128>}, {pipeline_mode = #tpu.pipeline_mode<synchronous>, transform_indices = @transform_2, window_bounds = array<i64: 1, 128>}, {transform_indices = @transform_3, window_bounds = array<i64: 4, 128>}]} {
    %c0 = arith.constant 0 : index
    %c0_0 = arith.constant 0 : index
    %0 = vector.load %arg1[%c0, %c0_0] : memref<4x128xf32, #tpu.memory_space<vmem>>, vector<4x128xf32>
    %1 = vector.extract_strided_slice %0 {offsets = [0, 0], sizes = [4, 32], strides = [1, 1]} : vector<4x128xf32> to vector<4x32xf32>
    %cst = arith.constant dense<0.000000e+00> : vector<4xf32>
    %2 = vector.multi_reduction <add>, %1, %cst [1] : vector<4x32xf32> to vector<4xf32>
    %3 = vector.shape_cast %2 : vector<4xf32> to vector<4x1xf32>
    %4 = arith.mulf %1, %1 : vector<4x32xf32>
    %cst_1 = arith.constant dense<0.000000e+00> : vector<4xf32>
    %5 = vector.multi_reduction <add>, %4, %cst_1 [1] : vector<4x32xf32> to vector<4xf32>
    %6 = vector.shape_cast %5 : vector<4xf32> to vector<4x1xf32>
    %cst_2 = arith.constant 3.125000e-02 : f32
    %7 = vector.broadcast %cst_2 : f32 to vector<4x1xf32>
    %8 = arith.mulf %3, %7 : vector<4x1xf32>
    %cst_3 = arith.constant 3.125000e-02 : f32
    %9 = vector.broadcast %cst_3 : f32 to vector<4x1xf32>
    %10 = arith.mulf %6, %9 : vector<4x1xf32>
    %11 = arith.mulf %8, %8 : vector<4x1xf32>
    %12 = arith.subf %10, %11 : vector<4x1xf32>
    %13 = vector.broadcast %8 : vector<4x1xf32> to vector<4x32xf32>
    %14 = arith.subf %1, %13 : vector<4x32xf32>
    %cst_4 = arith.constant 9.99999974E-6 : f32
    %15 = vector.broadcast %cst_4 : f32 to vector<4x1xf32>
    %16 = arith.addf %12, %15 : vector<4x1xf32>
    %17 = math.rsqrt %16 : vector<4x1xf32>
    %18 = vector.broadcast %17 : vector<4x1xf32> to vector<4x32xf32>
    %19 = arith.mulf %14, %18 : vector<4x32xf32>
    %20 = vector.extract_strided_slice %0 {offsets = [0, 32], sizes = [4, 32], strides = [1, 1]} : vector<4x128xf32> to vector<4x32xf32>
    %cst_5 = arith.constant dense<0.000000e+00> : vector<4xf32>
    %21 = vector.multi_reduction <add>, %20, %cst_5 [1] : vector<4x32xf32> to vector<4xf32>
    %22 = vector.shape_cast %21 : vector<4xf32> to vector<4x1xf32>
    %23 = arith.mulf %20, %20 : vector<4x32xf32>
    %cst_6 = arith.constant dense<0.000000e+00> : vector<4xf32>
    %24 = vector.multi_reduction <add>, %23, %cst_6 [1] : vector<4x32xf32> to vector<4xf32>
    %25 = vector.shape_cast %24 : vector<4xf32> to vector<4x1xf32>
    %cst_7 = arith.constant 3.125000e-02 : f32
    %26 = vector.broadcast %cst_7 : f32 to vector<4x1xf32>
    %27 = arith.mulf %22, %26 : vector<4x1xf32>
    %cst_8 = arith.constant 3.125000e-02 : f32
    %28 = vector.broadcast %cst_8 : f32 to vector<4x1xf32>
    %29 = arith.mulf %25, %28 : vector<4x1xf32>
    %30 = arith.mulf %27, %27 : vector<4x1xf32>
    %31 = arith.subf %29, %30 : vector<4x1xf32>
    %32 = vector.broadcast %27 : vector<4x1xf32> to vector<4x32xf32>
    %33 = arith.subf %20, %32 : vector<4x32xf32>
    %cst_9 = arith.constant 9.99999974E-6 : f32
    %34 = vector.broadcast %cst_9 : f32 to vector<4x1xf32>
    %35 = arith.addf %31, %34 : vector<4x1xf32>
    %36 = math.rsqrt %35 : vector<4x1xf32>
    %37 = vector.broadcast %36 : vector<4x1xf32> to vector<4x32xf32>
    %38 = arith.mulf %33, %37 : vector<4x32xf32>
    %39 = vector.extract_strided_slice %0 {offsets = [0, 64], sizes = [4, 32], strides = [1, 1]} : vector<4x128xf32> to vector<4x32xf32>
    %cst_10 = arith.constant dense<0.000000e+00> : vector<4xf32>
    %40 = vector.multi_reduction <add>, %39, %cst_10 [1] : vector<4x32xf32> to vector<4xf32>
    %41 = vector.shape_cast %40 : vector<4xf32> to vector<4x1xf32>
    %42 = arith.mulf %39, %39 : vector<4x32xf32>
    %cst_11 = arith.constant dense<0.000000e+00> : vector<4xf32>
    %43 = vector.multi_reduction <add>, %42, %cst_11 [1] : vector<4x32xf32> to vector<4xf32>
    %44 = vector.shape_cast %43 : vector<4xf32> to vector<4x1xf32>
    %cst_12 = arith.constant 3.125000e-02 : f32
    %45 = vector.broadcast %cst_12 : f32 to vector<4x1xf32>
    %46 = arith.mulf %41, %45 : vector<4x1xf32>
    %cst_13 = arith.constant 3.125000e-02 : f32
    %47 = vector.broadcast %cst_13 : f32 to vector<4x1xf32>
    %48 = arith.mulf %44, %47 : vector<4x1xf32>
    %49 = arith.mulf %46, %46 : vector<4x1xf32>
    %50 = arith.subf %48, %49 : vector<4x1xf32>
    %51 = vector.broadcast %46 : vector<4x1xf32> to vector<4x32xf32>
    %52 = arith.subf %39, %51 : vector<4x32xf32>
    %cst_14 = arith.constant 9.99999974E-6 : f32
    %53 = vector.broadcast %cst_14 : f32 to vector<4x1xf32>
    %54 = arith.addf %50, %53 : vector<4x1xf32>
    %55 = math.rsqrt %54 : vector<4x1xf32>
    %56 = vector.broadcast %55 : vector<4x1xf32> to vector<4x32xf32>
    %57 = arith.mulf %52, %56 : vector<4x32xf32>
    %58 = vector.extract_strided_slice %0 {offsets = [0, 96], sizes = [4, 32], strides = [1, 1]} : vector<4x128xf32> to vector<4x32xf32>
    %cst_15 = arith.constant dense<0.000000e+00> : vector<4xf32>
    %59 = vector.multi_reduction <add>, %58, %cst_15 [1] : vector<4x32xf32> to vector<4xf32>
    %60 = vector.shape_cast %59 : vector<4xf32> to vector<4x1xf32>
    %61 = arith.mulf %58, %58 : vector<4x32xf32>
    %cst_16 = arith.constant dense<0.000000e+00> : vector<4xf32>
    %62 = vector.multi_reduction <add>, %61, %cst_16 [1] : vector<4x32xf32> to vector<4xf32>
    %63 = vector.shape_cast %62 : vector<4xf32> to vector<4x1xf32>
    %cst_17 = arith.constant 3.125000e-02 : f32
    %64 = vector.broadcast %cst_17 : f32 to vector<4x1xf32>
    %65 = arith.mulf %60, %64 : vector<4x1xf32>
    %cst_18 = arith.constant 3.125000e-02 : f32
    %66 = vector.broadcast %cst_18 : f32 to vector<4x1xf32>
    %67 = arith.mulf %63, %66 : vector<4x1xf32>
    %68 = arith.mulf %65, %65 : vector<4x1xf32>
    %69 = arith.subf %67, %68 : vector<4x1xf32>
    %70 = vector.broadcast %65 : vector<4x1xf32> to vector<4x32xf32>
    %71 = arith.subf %58, %70 : vector<4x32xf32>
    %cst_19 = arith.constant 9.99999974E-6 : f32
    %72 = vector.broadcast %cst_19 : f32 to vector<4x1xf32>
    %73 = arith.addf %69, %72 : vector<4x1xf32>
    %74 = math.rsqrt %73 : vector<4x1xf32>
    %75 = vector.broadcast %74 : vector<4x1xf32> to vector<4x32xf32>
    %76 = arith.mulf %71, %75 : vector<4x32xf32>
    %77 = tpu.concatenate %19, %38, %57, %76 in 1 : vector<4x32xf32>, vector<4x32xf32>, vector<4x32xf32>, vector<4x32xf32> -> vector<4x128xf32>
    %c0_20 = arith.constant 0 : index
    %c0_21 = arith.constant 0 : index
    %78 = vector.load %arg2[%c0_20, %c0_21] : memref<1x128xf32, #tpu.memory_space<vmem>>, vector<1x128xf32>
    %79 = vector.broadcast %78 : vector<1x128xf32> to vector<4x128xf32>
    %80 = arith.mulf %77, %79 : vector<4x128xf32>
    %c0_22 = arith.constant 0 : index
    %c0_23 = arith.constant 0 : index
    %81 = vector.load %arg3[%c0_22, %c0_23] : memref<1x128xf32, #tpu.memory_space<vmem>>, vector<1x128xf32>
    %82 = vector.broadcast %81 : vector<1x128xf32> to vector<4x128xf32>
    %83 = arith.addf %80, %82 : vector<4x128xf32>
    %c0_24 = arith.constant 0 : index
    %c0_25 = arith.constant 0 : index
    %84 = vector.load %arg4[%c0_24, %c0_25] : memref<4x128xf32, #tpu.memory_space<vmem>>, vector<4x128xf32>
    tpu.vector_store %arg4[%c0_24, %c0_25], %83 {strides = array<i32>} : memref<4x128xf32, #tpu.memory_space<vmem>>, vector<4x128xf32>,
    return
  }
  func.func @transform_0(%arg0: i32) -> (i32, i32) {
    %c0_i32 = arith.constant 0 : i32
    %c0_i32_0 = arith.constant 0 : i32
    return %arg0, %c0_i32 : i32, i32
  }
  func.func @transform_1(%arg0: i32) -> (i32, i32) {
    %c0_i32 = arith.constant 0 : i32
    %c0_i32_0 = arith.constant 0 : i32
    %c0_i32_1 = arith.constant 0 : i32
    return %c0_i32, %c0_i32_0 : i32, i32
  }
  func.func @transform_2(%arg0: i32) -> (i32, i32) {
    %c0_i32 = arith.constant 0 : i32
    %c0_i32_0 = arith.constant 0 : i32
    %c0_i32_1 = arith.constant 0 : i32
    return %c0_i32, %c0_i32_0 : i32, i32
  }
  func.func @transform_3(%arg0: i32) -> (i32, i32) {
    %c0_i32 = arith.constant 0 : i32
    %c0_i32_0 = arith.constant 0 : i32
    return %arg0, %c0_i32 : i32, i32
  }
}

</mosaic_0001>

<llo_original>
// kernel: _layernorm_2d.1
$region0: #{_layernorm_2d.1}
  #allocation0 [shape = 'u32[]', space=smem, size = 0x4, offset = 0x4, fixed_abs, tag = 'smem constant byte address 0x4 - core index']
  #allocation1 [shape = 'u32[72,128]{1,0:T(1,128)}', space=vmem, size = 0x9000, scoped, tag = 'internal scratch']
  %s0 = inlined_call_operand.hbm [shape: f32[4,128], index: 0, kind: input, shape index: {}]
  %s1 = inlined_call_operand.hbm [shape: f32[1,128], index: 1, kind: input, shape index: {}]
  %s2 = inlined_call_operand.vmem [shape: f32[1,128], index: 2, kind: input, shape index: {}]
  %s3 = inlined_call_operand.hbm [shape: f32[4,128], index: 3, kind: output, shape index: {}]
  %s4 = sld [smem:[#allocation0]]
  $region30: #{_layernorm_2d.1} parent=0
    _
  %s6 = ssub.s32 1, %s4
  %s7 = scalar_select 0, %s6, %s4
  $region1: #{_layernorm_2d.1} parent=0
    #allocation2 [shape = 'u8[2048]{0}', space=vmem, size = 0x800, scoped, tag = 'input window, operand 0, single buffered']
    #allocation3 [shape = 's32[1]{0}', space=sflag, size = 0x4, scoped, tag = 'scoped memory for _layernorm_2d.1']
    #allocation4 [shape = 's32[1]{0}', space=sflag, size = 0x4, scoped, tag = 'scoped memory for _layernorm_2d.1']
    #allocation5 [shape = 'u8[512]{0}', space=vmem, size = 0x400, scoped, tag = 'input window, operand 1, single buffered']
    #allocation6 [shape = 's32[1]{0}', space=sflag, size = 0x4, scoped, tag = 'scoped memory for _layernorm_2d.1']
    #allocation7 [shape = 'u8[2048]{0}', space=vmem, size = 0x800, scoped, tag = 'output window, operand 0, single buffered']
    %8 = vsyncpa [#allocation3], 0
    %9 = vsyncpa [#allocation6], 0
    %10 = vsyncpa [#allocation4], 0
    // Predicated region
    $region2: #{_layernorm_2d.1} parent=1 // pred_check
      _
    $region3: #{_layernorm_2d.1} parent=1 // pred_check_branch
      %12 = sbr.rel (0) target = $region5
    $region4: #{_layernorm_2d.1} parent=1 // pred_region
      %14 = vsyncadd [#allocation3], 0
      %s16 = sshll.u32 %s0, 4
      %s17 = int_to_ptr.hbm [resolvable:$true] %s16
      %s18 = sshll.u32 [#allocation2], 4
      %s19 = int_to_ptr.vmem [resolvable:$true] %s18
      %21 = dma.hbm_to_vmem [thread:$0]  %s17, 64, %s19, [#allocation3]
    $region5: #{_layernorm_2d.1} parent=1 // pred_fallthru
      _
    // Predicated region
    $region6: #{_layernorm_2d.1} parent=1 // pred_check
      _
    $region7: #{_layernorm_2d.1} parent=1 // pred_check_branch
      %23 = sbr.rel (0) target = $region9
    $region8: #{_layernorm_2d.1} parent=1 // pred_region
      %25 = vsyncadd [#allocation6], 0
      %s27 = sshll.u32 %s1, 4
      %s28 = int_to_ptr.hbm [resolvable:$true] %s27
      %s29 = sshll.u32 [#allocation5], 4
      %s30 = int_to_ptr.vmem [resolvable:$true] %s29
      %32 = dma.hbm_to_vmem [thread:$0]  %s28, 16, %s30, [#allocation6]
    $region9: #{_layernorm_2d.1} parent=1 // pred_fallthru
      _
    // Predicated region
    $region10: #{_layernorm_2d.1} parent=1 // pred_check
      _
    $region11: #{_layernorm_2d.1} parent=1 // pred_check_branch
      %34 = sbr.rel (0) target = $region13
    $region12: #{_layernorm_2d.1} parent=1 // pred_region
      _
    $region13: #{_layernorm_2d.1} parent=1 // pred_fallthru
      _
    // Predicated region
    $region14: #{_layernorm_2d.1} parent=1 // pred_check
      _
    $region15: #{_layernorm_2d.1} parent=1 // pred_check_branch
      %36 = sbr.rel (0) target = $region17
    $region16: #{_layernorm_2d.1} parent=1 // pred_region
      %38 = dma.done [#allocation3], 64
    $region17: #{_layernorm_2d.1} parent=1 // pred_fallthru
      _
    // Predicated region
    $region18: #{_layernorm_2d.1} parent=1 // pred_check
      _
    $region19: #{_layernorm_2d.1} parent=1 // pred_check_branch
      %40 = sbr.rel (0) target = $region21
    $region20: #{_layernorm_2d.1} parent=1 // pred_region
      %42 = dma.done [#allocation6], 16
    $region21: #{_layernorm_2d.1} parent=1 // pred_fallthru
      _
    %v43 = vld [vmem:[#allocation2] sm:$0xf]
    %vm44 = vcmask 257024
    %v45 = vsel %vm44, %v43, 0.0
    %46 = vadd.xlane.f32.xlu0 %v45
    %v47 = vpop.xlane.xlu0 %46
    %v48 = vmul.f32 %v43, %v43
    %v49 = vsel %vm44, %v48, 0.0
    %50 = vadd.xlane.f32.xlu0 %v49
    %v51 = vpop.xlane.xlu0 %50
    %v52 = vmul.f32 %v47, 0.03125
    %v53 = vmul.f32 %v51, 0.03125
    %v54 = vmul.f32 %v52, %v52
    %v55 = vsub.f32 %v53, %v54
    %v56 = vsub.f32 %v43, %v52
    %v57 = vadd.f32 %v55, 1e-05
    %v58 = vrsqrt.pop %v57
    %v59 = vmul.f32 %v58, %v57
    %v60 = vmul.f32 %v59, %v58
    %v61 = vmul.f32 0.5, %v60
    %v62 = vsub.f32 1.5, %v61
    %v63 = vmul.f32 %v58, %v62
    %vm64 = vweird.f32 %v57
    %vm65 = vweird.f32 %v58
    %vm66 = vmor %vm64, %vm65
    %v67 = vsel %vm66, %v58, %v63
    %v68 = vmul.f32 %v56, %v67
    %70 = vrot.lane.b32.xlu0 %v43, 96
    %v71 = vpop.permute.xlu0 %70
    %v73 = vsel %vm44, %v71, 0.0
    %74 = vadd.xlane.f32.xlu0 %v73
    %v75 = vpop.xlane.xlu0 %74
    %77 = vrot.lane.b32.xlu0 %v48, 96
    %v78 = vpop.permute.xlu0 %77
    %v80 = vsel %vm44, %v78, 0.0
    %81 = vadd.xlane.f32.xlu0 %v80
    %v82 = vpop.xlane.xlu0 %81
    %v83 = vmul.f32 %v75, 0.03125
    %v84 = vmul.f32 %v82, 0.03125
    %v85 = vmul.f32 %v83, %v83
    %v86 = vsub.f32 %v84, %v85
    %v87 = vsub.f32 %v43, %v83
    %v88 = vadd.f32 %v86, 1e-05
    %v89 = vrsqrt.pop %v88
    %v90 = vmul.f32 %v89, %v88
    %v91 = vmul.f32 %v90, %v89
    %v92 = vmul.f32 0.5, %v91
    %v93 = vsub.f32 1.5, %v92
    %v94 = vmul.f32 %v89, %v93
    %vm95 = vweird.f32 %v88
    %vm96 = vweird.f32 %v89
    %vm97 = vmor %vm95, %vm96
    %v98 = vsel %vm97, %v89, %v94
    %v99 = vmul.f32 %v87, %v98
    %100 = vrot.lane.b32.xlu0 %v43, 64
    %v101 = vpop.permute.xlu0 %100
    %v103 = vsel %vm44, %v101, 0.0
    %104 = vadd.xlane.f32.xlu0 %v103
    %v105 = vpop.xlane.xlu0 %104
    %106 = vrot.lane.b32.xlu0 %v48, 64
    %v107 = vpop.permute.xlu0 %106
    %v109 = vsel %vm44, %v107, 0.0
    %110 = vadd.xlane.f32.xlu0 %v109
    %v111 = vpop.xlane.xlu0 %110
    %v112 = vmul.f32 %v105, 0.03125
    %v113 = vmul.f32 %v111, 0.03125
    %v114 = vmul.f32 %v112, %v112
    %v115 = vsub.f32 %v113, %v114
    %v116 = vsub.f32 %v43, %v112
    %v117 = vadd.f32 %v115, 1e-05
    %v118 = vrsqrt.pop %v117
    %v119 = vmul.f32 %v118, %v117
    %v120 = vmul.f32 %v119, %v118
    %v121 = vmul.f32 0.5, %v120
    %v122 = vsub.f32 1.5, %v121
    %v123 = vmul.f32 %v118, %v122
    %vm124 = vweird.f32 %v117
    %vm125 = vweird.f32 %v118
    %vm126 = vmor %vm124, %vm125
    %v127 = vsel %vm126, %v118, %v123
    %v128 = vmul.f32 %v116, %v127
    %129 = vrot.lane.b32.xlu0 %v43, 32
    %v130 = vpop.permute.xlu0 %129
    %v132 = vsel %vm44, %v130, 0.0
    %133 = vadd.xlane.f32.xlu0 %v132
    %v134 = vpop.xlane.xlu0 %133
    %135 = vrot.lane.b32.xlu0 %v48, 32
    %v136 = vpop.permute.xlu0 %135
    %v138 = vsel %vm44, %v136, 0.0
    %139 = vadd.xlane.f32.xlu0 %v138
    %v140 = vpop.xlane.xlu0 %139
    %v141 = vmul.f32 %v134, 0.03125
    %v142 = vmul.f32 %v140, 0.03125
    %v143 = vmul.f32 %v141, %v141
    %v144 = vsub.f32 %v142, %v143
    %v145 = vsub.f32 %v43, %v141
    %v146 = vadd.f32 %v144, 1e-05
    %v147 = vrsqrt.pop %v146
    %v148 = vmul.f32 %v147, %v146
    %v149 = vmul.f32 %v148, %v147
    %v150 = vmul.f32 0.5, %v149
    %v151 = vsub.f32 1.5, %v150
    %v152 = vmul.f32 %v147, %v151
    %vm153 = vweird.f32 %v146
    %vm154 = vweird.f32 %v147
    %vm155 = vmor %vm153, %vm154
    %v156 = vsel %vm155, %v147, %v152
    %v157 = vmul.f32 %v145, %v156
    %vm158 = vcmask 261120
    %v159 = vsel %vm158, %v68, %v99
    %vm160 = vcmask 523264
    %v161 = vsel %vm160, %v159, %v128
    %vm162 = vcmask 785408
    %v163 = vsel %vm162, %v161, %v157
    %v164 = vld [vmem:[#allocation5] sm:$0x1]
    %v166 = vperm.slane %v164, 0
    %v168 = vmul.f32 %v163, %v166
    %v169 = vld [vmem:[%s2] sm:$0x1]
    %v171 = vperm.slane %v169, 0
    %v173 = vadd.f32 %v168, %v171
    %174 = vst [vmem:[#allocation7] sm:$0xf] %v173
    // Predicated region
    $region22: #{_layernorm_2d.1} parent=1 // pred_check
      _
    $region23: #{_layernorm_2d.1} parent=1 // pred_check_branch
      %176 = sbr.rel (0) target = $region25
    $region24: #{_layernorm_2d.1} parent=1 // pred_region
      %178 = vsyncadd [#allocation4], 0
      %s180 = sshll.u32 [#allocation7], 4
      %s181 = int_to_ptr.vmem [resolvable:$true] %s180
      %s182 = sshll.u32 %s3, 4
      %s183 = int_to_ptr.hbm [resolvable:$true] %s182
      %185 = dma.vmem_to_hbm [thread:$0]  %s181, 64, %s183, [#allocation4]
    $region25: #{_layernorm_2d.1} parent=1 // pred_fallthru
      _
    // Predicated region
    $region26: #{_layernorm_2d.1} parent=1 // pred_check
      _
    $region27: #{_layernorm_2d.1} parent=1 // pred_check_branch
      %187 = sbr.rel (0) target = $region29
    $region28: #{_layernorm_2d.1} parent=1 // pred_region
      %189 = dma.done [#allocation4], 64
    $region29: #{_layernorm_2d.1} parent=1 // pred_fallthru
      _
    %190 = vsyncpa [#allocation3], 1
    %191 = vsyncpa [#allocation6], 1
    %192 = vsyncpa [#allocation4], 1

</llo_original>
